<compile_context>
chip_gen: v7x
topology: tpu7x:2x2x1
jax: 0.10.0
libtpu: 0.0.40
codegen_flags: <defaults>
</compile_context>

<pallas_src>
import functools
import math

import numpy as np
import jax
import jax.numpy as jnp
from jax.experimental import pallas as pl
from jax.experimental.pallas import tpu as pltpu

ADD_LEN = 320
ORIG_FREQ = 16000
FACTORS = (0.9, 1.1, 1.0)
LOWPASS_FILTER_WIDTH = 6
ROLLOFF = 0.99

_BF_MAX = 4096          # max frames (lanes) per grid step
_CHUNK = 512            # in-kernel lane chunk (bounds vreg pressure)
_BUCKET = ORIG_FREQ     # bucket clip length to 1 s to bound recompiles


def _cdiv(a, b):
    return -(-a // b)


def _round_up(a, b):
    return _cdiv(a, b) * b


@functools.lru_cache(maxsize=None)
def _sinc_kernel_np(orig, new):
    """numpy replica of torchaudio._get_sinc_resample_kernel ('sinc_interp_hann')."""
    base_freq = min(orig, new) * ROLLOFF
    width = int(math.ceil(LOWPASS_FILTER_WIDTH * orig / base_freq))
    idx = np.arange(-width, width + orig, dtype=np.float64) / orig
    t = np.arange(0, -new, -1, dtype=np.float64)[:, None] / new + idx[None, :]
    t = t * base_freq
    t = np.clip(t, -LOWPASS_FILTER_WIDTH, LOWPASS_FILTER_WIDTH)
    window = np.cos(t * math.pi / LOWPASS_FILTER_WIDTH / 2) ** 2
    t = t * math.pi
    scale = base_freq / orig
    safe_t = np.where(t == 0.0, 1.0, t)
    kernels = np.where(t == 0.0, 1.0, np.sin(safe_t) / safe_t) * window * scale
    return kernels.astype(np.float32), width           # (new, K), K = 2*width + orig


@functools.lru_cache(maxsize=None)
def _resample_tables(orig, new):
    """Flat filter matrix (new, Kp) for the im2col matmul, Kp = n_q*orig >= K."""
    w, width = _sinc_kernel_np(orig, new)               # (new, K)
    K = w.shape[1]
    n_q = _cdiv(K, orig)
    kp = n_q * orig
    w_pad = np.zeros((new, kp), np.float32)
    w_pad[:, :K] = w
    return w_pad, width, n_q, kp


def _resample_kernel(x_ref, w_ref, o_ref):
    # x_ref: (Kp, bf)   im2col'd input columns of this frame block
    # w_ref: (new, Kp)  sinc filter taps (small, resident, same every step)
    # o_ref: (new, bf)  transposed, lane-dense output block
    # One (new, Kp) @ (Kp, chunk) matmul per 512-lane chunk (static unroll);
    # chunk starts are multiples of 512 so every ref slice is lane-aligned.
    w = w_ref[...]
    bf = o_ref.shape[-1]
    start = 0
    while start < bf:
        size = min(_CHUNK, bf - start)
        sl = slice(start, start + size)
        o_ref[:, sl] = jnp.dot(
            w, x_ref[:, sl], preferred_element_type=jnp.float32
        ).astype(o_ref.dtype)
        start += size


def _pick_block(n_frames, n_rows):
    """Frame-block (lane) width: as large as possible, while (a) keeping >= ~4
    total grid steps so both v7x TensorCores get work and (b) minimizing
    trailing-frame padding (bf = round_up(ceil(F / n_blocks), 128))."""
    n_blocks = _cdiv(n_frames, _BF_MAX)
    while n_rows * n_blocks < 4 and _cdiv(n_frames, n_blocks + 1) >= 128:
        n_blocks += 1
    return _round_up(_cdiv(n_frames, n_blocks), 128)


@functools.partial(jax.jit, static_argnums=(1, 2))
def _resample_padded(x, orig, new):
    """x: (N, T_b) -> (N, n_frames_pad*new): torchaudio sinc resample of the
    (zero-bucket-padded) clip; the caller trims to the exact final length."""
    N, T = x.shape
    w_flat, width, n_q, kp = _resample_tables(orig, new)

    n_out = _cdiv(new * T, orig)                 # ceil(new * T_b / orig)
    n_frames = _cdiv(n_out, new)
    bf = _pick_block(n_frames, N)
    n_frames_pad = _round_up(n_frames, bf)
    n_blocks = n_frames_pad // bf
    n_cols = n_frames_pad + (n_q - 1)            # only n_q-1 extra halo columns
    total = n_cols * orig

    # x_padded = [width zeros | x | zeros]; im2col (one fused XLA layout pass):
    #   x_im2col[n, q*orig + r, c] = x_padded[n, (c + q)*orig + r]
    t_used = min(T, total - width)               # samples past this never reach a kept frame
    buf = jnp.zeros((N, total), x.dtype).at[:, width:width + t_used].set(x[:, :t_used])
    cols = buf.reshape(N, n_cols, orig).transpose(0, 2, 1)        # (N, orig, n_cols)
    x_im2col = jnp.concatenate(
        [jax.lax.slice_in_dim(cols, q, q + n_frames_pad, axis=2) for q in range(n_q)],
        axis=1)                                                    # (N, Kp, F_pad)

    out_t = pl.pallas_call(
        _resample_kernel,
        out_shape=jax.ShapeDtypeStruct((N, new, n_frames_pad), x.dtype),
        grid=(N, n_blocks),
        in_specs=[
            pl.BlockSpec((None, kp, bf), lambda b, j: (b, 0, j)),
            pl.BlockSpec((new, kp), lambda b, j: (0, 0)),
        ],
        out_specs=pl.BlockSpec((None, new, bf), lambda b, j: (b, 0, j)),
        compiler_params=pltpu.CompilerParams(
            dimension_semantics=("parallel", "parallel"),
            # working set < ~2 MiB/step regardless of clip length; keep the
            # limit explicit but bounded (v7x has only 64 MiB physical VMEM).
            vmem_limit_bytes=32 * 1024 * 1024,
        ),
    )(x_im2col, jnp.asarray(w_flat))

    # (N, new, F_pad) -> (N, F_pad, new) -> interleaved (N, F_pad*new).
    return out_t.transpose(0, 2, 1).reshape(N, n_frames_pad * new)


def _resample_ref(x, orig, new):
    """Pure-JAX reference of the torchaudio sinc resample (correctness check only)."""
    N, T = x.shape
    w, width = _sinc_kernel_np(orig, new)
    K = w.shape[1]
    x_pad = jnp.pad(x, ((0, 0), (width, width + orig)))
    n_frames = T // orig + 1
    gather = jnp.arange(n_frames)[:, None] * orig + jnp.arange(K)[None, :]
    frames = x_pad[:, gather]                            # (N, n_frames, K)
    y = jnp.einsum("bfk,jk->bfj", frames, jnp.asarray(w),
                   precision=jax.lax.Precision.HIGHEST).reshape(N, -1)
    return y[:, : _cdiv(new * T, orig)]


class SpeedPerturbation:
    """JAX/Pallas port of the PyTorch SpeedPerturbation module."""

    def __init__(self):
        self.add_len = ADD_LEN
        self.orig_freq = ORIG_FREQ
        self.factors = FACTORS

    def forward_with_factor(self, x, factor_idx):
        factor = self.factors[factor_idx]
        B, C, T = x.shape
        source = int(factor * self.orig_freq)
        g = math.gcd(source, self.orig_freq)
        orig, new = source // g, self.orig_freq // g

        out_len = T if orig == new else _cdiv(new * T, orig)
        final_len = out_len - (out_len % self.add_len)

        x_flat = x.reshape(B * C, T)
        if orig == new:                                  # factor == 1.0 -> identity
            y = x_flat[:, :final_len]
        else:
            # Bucket the clip length (zero pad) so the number of distinct
            # jit/pallas compiles stays small for variable-length audio; the
            # extra zero-input frames are trimmed below and never change the
            # kept samples (torchaudio also right-pads with zeros).
            t_b = max(_BUCKET, _round_up(T, _BUCKET))
            if t_b > T:
                x_flat = jnp.pad(x_flat, ((0, 0), (0, t_b - T)))
            y = _resample_padded(x_flat, orig, new)[:, :final_len]

        y = y.reshape(B, C, final_len)
        # PyTorch does .squeeze(1) then trims dim 1; time is already trimmed
        # above.  TODO(synk): for C > 1 the original would trim *channels*
        # (latent upstream bug); we keep channels and trim time instead.
        if C == 1:
            y = y[:, 0, :]
        return y

    def __call__(self, x, key):
        # torch.randint over the 3 factors; the output *shape* depends on the
        # draw, so the choice is resolved host-side from the deterministic key.
        idx = int(jax.random.randint(key, (), 0, len(self.factors)))
        return self.forward_with_factor(x, idx)


if __name__ == "__main__":
    key = jax.random.PRNGKey(0)
    k_x, k_long, k_choice = jax.random.split(key, 3)
    module = SpeedPerturbation()

    B, C, T = 2, 1, 800
    x = jax.random.normal(k_x, (B, C, T), dtype=jnp.float32)

    # Exercise all three factor branches (0.9 and 1.1 run the Pallas kernel).
    for idx, factor in enumerate(FACTORS):
        y = jax.block_until_ready(module.forward_with_factor(x, idx))
        assert y.shape[-1] % ADD_LEN == 0, y.shape
        if factor != 1.0:
            source = int(factor * ORIG_FREQ)
            g = math.gcd(source, ORIG_FREQ)
            orig, new = source // g, ORIG_FREQ // g
            ref = _resample_ref(x.reshape(B * C, T), orig, new)
            rem = ref.shape[-1] % ADD_LEN
            if rem != 0:
                ref = ref[:, :-rem]
            assert y.shape == ref.shape, (y.shape, ref.shape)
            err = float(jnp.max(jnp.abs(y - ref)))
            assert jnp.allclose(y, ref, rtol=1e-3, atol=1e-3), err

    # A longer clip exercises the multi-block (frame-tiled) grid path.
    T2 = 48000
    x2 = jax.random.normal(k_long, (B, C, T2), dtype=jnp.float32)
    y2 = jax.block_until_ready(module.forward_with_factor(x2, 0))
    assert y2.shape[-1] % ADD_LEN == 0, y2.shape
    src = int(FACTORS[0] * ORIG_FREQ)
    g = math.gcd(src, ORIG_FREQ)
    ref2 = _resample_ref(x2.reshape(B * C, T2), src // g, ORIG_FREQ // g)
    rem2 = ref2.shape[-1] % ADD_LEN
    if rem2 != 0:
        ref2 = ref2[:, :-rem2]
    assert y2.shape == ref2.shape, (y2.shape, ref2.shape)
    err2 = float(jnp.max(jnp.abs(y2 - ref2)))
    assert jnp.allclose(y2, ref2, rtol=1e-3, atol=1e-3), err2

    # The module's actual (randomized) forward, deterministic under PRNGKey(0).
    y_rand = jax.block_until_ready(module(x, k_choice))
    assert y_rand.shape[-1] % ADD_LEN == 0

    print("KERNEL_OK")
</pallas_src>

<mosaic_0001>
module attributes {stable_mosaic.version = 11 : i64} {
  func.func @_resample_kernel(%arg0: i32, %arg1: i32, %arg2: memref<1x27x896xf32, #tpu.memory_space<vmem>>, %arg3: memref<10x27xf32, #tpu.memory_space<vmem>>, %arg4: memref<1x10x896xf32, #tpu.memory_space<vmem>>) attributes {dimension_semantics = [#tpu.dimension_semantics<parallel>, #tpu.dimension_semantics<parallel>], iteration_bounds = array<i64: 2, 2>, scalar_prefetch = 0 : i64, scratch_operands = 0 : i64, tpu.core_type = #tpu.core_type<tc>, window_params = [{transform_indices = @transform_0, window_bounds = array<i64: 1, 27, 896>}, {pipeline_mode = #tpu.pipeline_mode<synchronous>, transform_indices = @transform_1, window_bounds = array<i64: 10, 27>}, {transform_indices = @transform_2, window_bounds = array<i64: 1, 10, 896>}]} {
    %c0 = arith.constant 0 : index
    %c0_0 = arith.constant 0 : index
    %0 = vector.load %arg3[%c0, %c0_0] : memref<10x27xf32, #tpu.memory_space<vmem>>, vector<10x27xf32>
    %c0_1 = arith.constant 0 : index
    %c0_2 = arith.constant 0 : index
    %c0_3 = arith.constant 0 : index
    %1 = vector.load %arg2[%c0_1, %c0_2, %c0_3] : memref<1x27x896xf32, #tpu.memory_space<vmem>>, vector<1x27x512xf32>
    %2 = vector.shape_cast %1 : vector<1x27x512xf32> to vector<27x512xf32>
    %cst = arith.constant dense<0.000000e+00> : vector<10x512xf32>
    %3 = tpu.matmul %0, %2, %cst {dimension_numbers = #tpu.dot_dimension_numbers<[1], [0], [0], [1], [0, 0, 1, 1], [], []>} : vector<10x27xf32>, vector<27x512xf32>, vector<10x512xf32> -> vector<10x512xf32>
    %c0_4 = arith.constant 0 : index
    %c0_5 = arith.constant 0 : index
    %c0_6 = arith.constant 0 : index
    %4 = vector.load %arg4[%c0_4, %c0_5, %c0_6] : memref<1x10x896xf32, #tpu.memory_space<vmem>>, vector<1x10x512xf32>
    %5 = vector.shape_cast %4 : vector<1x10x512xf32> to vector<10x512xf32>
    %6 = vector.shape_cast %3 : vector<10x512xf32> to vector<1x10x512xf32>
    tpu.vector_store %arg4[%c0_4, %c0_5, %c0_6], %6 {strides = array<i32>} : memref<1x10x896xf32, #tpu.memory_space<vmem>>, vector<1x10x512xf32>,
    %c0_7 = arith.constant 0 : index
    %c0_8 = arith.constant 0 : index
    %c512 = arith.constant 512 : index
    %7 = vector.load %arg2[%c0_7, %c0_8, %c512] : memref<1x27x896xf32, #tpu.memory_space<vmem>>, vector<1x27x384xf32>
    %8 = vector.shape_cast %7 : vector<1x27x384xf32> to vector<27x384xf32>
    %cst_9 = arith.constant dense<0.000000e+00> : vector<10x384xf32>
    %9 = tpu.matmul %0, %8, %cst_9 {dimension_numbers = #tpu.dot_dimension_numbers<[1], [0], [0], [1], [0, 0, 1, 1], [], []>} : vector<10x27xf32>, vector<27x384xf32>, vector<10x384xf32> -> vector<10x384xf32>
    %c0_10 = arith.constant 0 : index
    %c0_11 = arith.constant 0 : index
    %c512_12 = arith.constant 512 : index
    %10 = vector.load %arg4[%c0_10, %c0_11, %c512_12] : memref<1x10x896xf32, #tpu.memory_space<vmem>>, vector<1x10x384xf32>
    %11 = vector.shape_cast %10 : vector<1x10x384xf32> to vector<10x384xf32>
    %12 = vector.shape_cast %9 : vector<10x384xf32> to vector<1x10x384xf32>
    tpu.vector_store %arg4[%c0_10, %c0_11, %c512_12], %12 {strides = array<i32>} : memref<1x10x896xf32, #tpu.memory_space<vmem>>, vector<1x10x384xf32>,
    return
  }
  func.func @transform_0(%arg0: i32, %arg1: i32) -> (i32, i32, i32) {
    %c0_i32 = arith.constant 0 : i32
    %c0_i32_0 = arith.constant 0 : i32
    return %arg0, %c0_i32, %arg1 : i32, i32, i32
  }
  func.func @transform_1(%arg0: i32, %arg1: i32) -> (i32, i32) {
    %c0_i32 = arith.constant 0 : i32
    %c0_i32_0 = arith.constant 0 : i32
    %c0_i32_1 = arith.constant 0 : i32
    return %c0_i32, %c0_i32_0 : i32, i32
  }
  func.func @transform_2(%arg0: i32, %arg1: i32) -> (i32, i32, i32) {
    %c0_i32 = arith.constant 0 : i32
    %c0_i32_0 = arith.constant 0 : i32
    return %arg0, %c0_i32, %arg1 : i32, i32, i32
  }
}

</mosaic_0001>

<llo_original>
// kernel: _resample_padded.1
$region0: #{_resample_padded.1}
  #allocation0 [shape = 'u32[]', space=smem, size = 0x4, offset = 0x4, fixed_abs, tag = 'smem constant byte address 0x4 - core index']
  #allocation1 [shape = 'u32[144,128]{1,0:T(1,128)}', space=vmem, size = 0x12000, scoped, tag = 'internal scratch']
  %s0 = inlined_call_operand.vmem [shape: f32[2,27,1792], index: 0, kind: input, shape index: {}]
  %s1 = inlined_call_operand.vmem [shape: f32[10,27], index: 1, kind: input, shape index: {}]
  %s2 = inlined_call_operand.vmem [shape: f32[2,10,1792], index: 2, kind: output, shape index: {}]
  %s3 = sld [smem:[#allocation0]]
  $region83: #{_resample_padded.1} parent=0
    _
  %s5 = ssub.s32 1, %s3
  %s6 = scalar_select 0, %s5, %s3
  $region1: #{_resample_padded.1} parent=0
    #allocation2 [shape = 'u8[229376]{0}', space=vmem, size = 0x38000, scoped, tag = 'input window, operand 0']
    #allocation3 [shape = 'u8[114688]{0}', space=vmem, size = 0x1c000, scoped, tag = 'output window, operand 0']
    loop: start=0, step=1, limit=6
    $region2: #{_resample_padded.1} parent=1 // loop_pre_header
      _
    $region3: #{_resample_padded.1} parent=1 // loop_header
      %s8 = sphi 0, %s12
      %p9 = scmp.ge.s32.totalorder %s8, 6
      %s15 = sphi 0, %s27
      %s16 = sphi 0, %s23
      %s17 = sphi 0, %s15
      %s18 = sphi 0, %s16
      %s19 = sphi 0, %s17
      %s20 = sphi 0, %s18
      %s32 = sphi 0, %s34
      %s35 = sphi 0, %s32
      %s36 = sphi 0, %s35
      %s52 = sphi 0, %s36
      %s56 = sphi 0, %s56
      %s58 = sphi 0, %s56
      %s59 = sphi 0, %s58
      %s73 = sphi 0, %s59
      %s81 = sphi 0, %s83
      %s84 = sphi 0, %s81
      %s85 = sphi 0, %s84
      %s101 = sphi 0, %s85
    $region4: #{_resample_padded.1} parent=1 // loop_header_branch
      %11 = sbr.rel (%p9) target = $region8
    $region5: #{_resample_padded.1} parent=1 // loop_body
      %s13 = ssub.s32 %s8, 1
      %s14 = ssub.s32 %s8, 2
      %s21 = sadd.s32 1, %s16
      %p22 = scmp.ge.s32.totalorder %s21, 2
      %s23 = scalar_select %p22, 0, %s21
      %s24 = sadd.s32 1, %s15
      %s25 = scalar_select %p22, %s24, %s15
      %p26 = scmp.ge.s32.totalorder %s25, 2
      %s27 = scalar_select %p26, 0, %s25
      %s28 = ssub.s32 %s15, %s27
      %s29 = ssub.s32 %s16, %s23
      %s30 = sor.u32 %s28, %s29
      %p31 = scmp.eq.s32.totalorder %s30, 0
      %s33 = sadd.s32 %s32, 1
      %s34 = scalar_select %p31, %s32, %s33
      %p37 = pneg %p31
      %p38 = scmp.eq.s32.totalorder %s8, 3
      %p39 = por %p37, %p38
      %p40 = scmp.ne.s32.totalorder %s32, %s35
      %p41 = scmp.eq.s32.totalorder %s8, 0
      %p42 = por %p40, %p41
      %p43 = scmp.ne.s32.totalorder %s32, %s35
      %p44 = scmp.eq.s32.totalorder %s13, 3
      %p45 = por %p43, %p44
      %p46 = scmp.ne.s32.totalorder %s35, %s36
      %p47 = scmp.eq.s32.totalorder %s13, 0
      %p48 = por %p46, %p47
      %p49 = scmp.ne.s32.totalorder %s35, %s36
      %p50 = scmp.eq.s32.totalorder %s14, 3
      %p51 = por %p49, %p50
      %p53 = scmp.ne.s32.totalorder %s36, %s52
      %p54 = scmp.eq.s32.totalorder %s14, 0
      %p55 = por %p53, %p54
      %s57 = sadd.s32 %s56, 1
      %p60 = scmp.eq.s32.totalorder %s8, 3
      %p61 = scmp.ne.s32.totalorder %s56, %s58
      %p62 = scmp.eq.s32.totalorder %s8, 0
      %p63 = por %p61, %p62
      %p64 = scmp.ne.s32.totalorder %s56, %s58
      %p65 = scmp.eq.s32.totalorder %s13, 3
      %p66 = por %p64, %p65
      %p67 = scmp.ne.s32.totalorder %s58, %s59
      %p68 = scmp.eq.s32.totalorder %s13, 0
      %p69 = por %p67, %p68
      %p70 = scmp.ne.s32.totalorder %s58, %s59
      %p71 = scmp.eq.s32.totalorder %s14, 3
      %p72 = por %p70, %p71
      %p74 = scmp.ne.s32.totalorder %s59, %s73
      %p75 = scmp.eq.s32.totalorder %s14, 0
      %p76 = por %p74, %p75
      %s77 = ssub.s32 %s15, %s27
      %s78 = ssub.s32 %s16, %s23
      %s79 = sor.u32 %s77, %s78
      %p80 = scmp.eq.s32.totalorder %s79, 0
      %s82 = sadd.s32 %s81, 1
      %s83 = scalar_select %p80, %s81, %s82
      %p86 = pneg %p80
      %p87 = scmp.eq.s32.totalorder %s8, 3
      %p88 = por %p86, %p87
      %p89 = scmp.ne.s32.totalorder %s81, %s84
      %p90 = scmp.eq.s32.totalorder %s8, 0
      %p91 = por %p89, %p90
      %p92 = scmp.ne.s32.totalorder %s81, %s84
      %p93 = scmp.eq.s32.totalorder %s13, 3
      %p94 = por %p92, %p93
      %p95 = scmp.ne.s32.totalorder %s84, %s85
      %p96 = scmp.eq.s32.totalorder %s13, 0
      %p97 = por %p95, %p96
      %p98 = scmp.ne.s32.totalorder %s84, %s85
      %p99 = scmp.eq.s32.totalorder %s14, 3
      %p100 = por %p98, %p99
      %p102 = scmp.ne.s32.totalorder %s85, %s101
      %p103 = scmp.eq.s32.totalorder %s14, 0
      %p104 = por %p102, %p103
      %p105 = scmp.le.s32.totalorder 1, %s8
      %p106 = scmp.lt.s32.totalorder %s8, 5
      %p107 = pnand %p105, %p106
      %p108 = pneg %p107
      // Predicated region
      $region9: #{_resample_padded.1} parent=5 // pred_check
        _
      $region10: #{_resample_padded.1} parent=5 // pred_check_branch
        %110 = sbr.rel (%p107) target = $region12
      $region11: #{_resample_padded.1} parent=5 // pred_region
        %s111 = ssub.s32 %s8, 1
        // Predicated region
        $region13: #{_resample_padded.1} parent=11 // pred_check
          %p112 = pneg %p69
        $region14: #{_resample_padded.1} parent=11 // pred_check_branch
          %114 = sbr.rel (%p112) target = $region16
        $region15: #{_resample_padded.1} parent=11 // pred_region
          _
        $region16: #{_resample_padded.1} parent=11 // pred_fallthru
          _
      $region12: #{_resample_padded.1} parent=5 // pred_fallthru
        _
      %p115 = scmp.lt.s32.totalorder %s8, 4
      // Predicated region
      $region17: #{_resample_padded.1} parent=5 // pred_check
        %p116 = pneg %p115
      $region18: #{_resample_padded.1} parent=5 // pred_check_branch
        %118 = sbr.rel (%p116) target = $region20
      $region19: #{_resample_padded.1} parent=5 // pred_region
        // Predicated region
        $region21: #{_resample_padded.1} parent=19 // pred_check
          %p119 = pneg %p42
        $region22: #{_resample_padded.1} parent=19 // pred_check_branch
          %121 = sbr.rel (%p119) target = $region24
        $region23: #{_resample_padded.1} parent=19 // pred_region
          %s122 = sand.u32 %s32, 1
          %s123 = sand.u32 %s32, 1
          %s124 = smul.addr %s123, 224
          %s125 = scalar_lea.vmem [#allocation2], %s124
          %s126 = smul.u32 7, %s16
          %s127 = smul.addr %s15, 56
          %s128 = sadd.s32 %s126, %s127
          %s129 = smul.addr %s128, 8
          %s130 = scalar_lea.vmem %s0, %s129
          // Predicated region
          $region25: #{_resample_padded.1} parent=23 // pred_check
            _
          $region26: #{_resample_padded.1} parent=23 // pred_check_branch
            %132 = sbr.rel (0) target = $region28
          $region27: #{_resample_padded.1} parent=23 // pred_region
            // Predicated region
            $region29: #{_resample_padded.1} parent=27 // pred_check
              _
            $region30: #{_resample_padded.1} parent=27 // pred_check_branch
              %134 = sbr.rel (0) target = $region32
            $region31: #{_resample_padded.1} parent=27 // pred_region
              loop: start=0, step=1, limit=1
              $region33: #{_resample_padded.1} parent=31 // loop_pre_header
                _
              $region34: #{_resample_padded.1} parent=31 // loop_header
                %s136 = sphi 0, %s140
                %p137 = scmp.ge.s32.totalorder %s136, 1
                %s141 = sphi %s130, %s130
                %s142 = sphi %s125, %s125
              $region35: #{_resample_padded.1} parent=31 // loop_header_branch
                %139 = sbr.rel (%p137) target = $region39
              $region36: #{_resample_padded.1} parent=31 // loop_body
                %v143 = vld [vmem:[%s141] sm:$0xff]
                %144 = vst [vmem:[%s142] sm:$0xff] %v143
                %v145 = vld [vmem:[%s141 + $0x8] sm:$0xff]
                %146 = vst [vmem:[%s142 + $0x8] sm:$0xff] %v145
                %v147 = vld [vmem:[%s141 + $0x10] sm:$0xff]
                %148 = vst [vmem:[%s142 + $0x10] sm:$0xff] %v147
                %v149 = vld [vmem:[%s141 + $0x18] sm:$0xff]
                %150 = vst [vmem:[%s142 + $0x18] sm:$0xff] %v149
                %v151 = vld [vmem:[%s141 + $0x20] sm:$0xff]
                %152 = vst [vmem:[%s142 + $0x20] sm:$0xff] %v151
                %v153 = vld [vmem:[%s141 + $0x28] sm:$0xff]
                %154 = vst [vmem:[%s142 + $0x28] sm:$0xff] %v153
                %v155 = vld [vmem:[%s141 + $0x30] sm:$0xff]
                %156 = vst [vmem:[%s142 + $0x30] sm:$0xff] %v155
                %v157 = vld [vmem:[%s141 + $0x70] sm:$0xff]
                %158 = vst [vmem:[%s142 + $0x38] sm:$0xff] %v157
                %v159 = vld [vmem:[%s141 + $0x78] sm:$0xff]
                %160 = vst [vmem:[%s142 + $0x40] sm:$0xff] %v159
                %v161 = vld [vmem:[%s141 + $0x80] sm:$0xff]
                %162 = vst [vmem:[%s142 + $0x48] sm:$0xff] %v161
                %v163 = vld [vmem:[%s141 + $0x88] sm:$0xff]
                %164 = vst [vmem:[%s142 + $0x50] sm:$0xff] %v163
                %v165 = vld [vmem:[%s141 + $0x90] sm:$0xff]
                %166 = vst [vmem:[%s142 + $0x58] sm:$0xff] %v165
                %v167 = vld [vmem:[%s141 + $0x98] sm:$0xff]
                %168 = vst [vmem:[%s142 + $0x60] sm:$0xff] %v167
                %v169 = vld [vmem:[%s141 + $0xa0] sm:$0xff]
                %170 = vst [vmem:[%s142 + $0x68] sm:$0xff] %v169
                %v171 = vld [vmem:[%s141 + $0xe0] sm:$0xff]
                %172 = vst [vmem:[%s142 + $0x70] sm:$0xff] %v171
                %v173 = vld [vmem:[%s141 + $0xe8] sm:$0xff]
                %174 = vst [vmem:[%s142 + $0x78] sm:$0xff] %v173
                %v175 = vld [vmem:[%s141 + $0xf0] sm:$0xff]
                %176 = vst [vmem:[%s142 + $0x80] sm:$0xff] %v175
                %v177 = vld [vmem:[%s141 + $0xf8] sm:$0xff]
                %178 = vst [vmem:[%s142 + $0x88] sm:$0xff] %v177
                %v179 = vld [vmem:[%s141 + $0x100] sm:$0xff]
                %180 = vst [vmem:[%s142 + $0x90] sm:$0xff] %v179
                %v181 = vld [vmem:[%s141 + $0x108] sm:$0xff]
                %182 = vst [vmem:[%s142 + $0x98] sm:$0xff] %v181
                %v183 = vld [vmem:[%s141 + $0x110] sm:$0xff]
                %184 = vst [vmem:[%s142 + $0xa0] sm:$0xff] %v183
                %v185 = vld [vmem:[%s141 + $0x150] sm:$0xff]
                %186 = vst [vmem:[%s142 + $0xa8] sm:$0xff] %v185
                %v187 = vld [vmem:[%s141 + $0x158] sm:$0xff]
                %188 = vst [vmem:[%s142 + $0xb0] sm:$0xff] %v187
                %v189 = vld [vmem:[%s141 + $0x160] sm:$0xff]
                %190 = vst [vmem:[%s142 + $0xb8] sm:$0xff] %v189
                %v191 = vld [vmem:[%s141 + $0x168] sm:$0xff]
                %192 = vst [vmem:[%s142 + $0xc0] sm:$0xff] %v191
                %v193 = vld [vmem:[%s141 + $0x170] sm:$0xff]
                %194 = vst [vmem:[%s142 + $0xc8] sm:$0xff] %v193
                %v195 = vld [vmem:[%s141 + $0x178] sm:$0xff]
                %196 = vst [vmem:[%s142 + $0xd0] sm:$0xff] %v195
                %v197 = vld [vmem:[%s141 + $0x180] sm:$0xff]
                %198 = vst [vmem:[%s142 + $0xd8] sm:$0xff] %v197
              $region37: #{_resample_padded.1} parent=31 // loop_footer
                %s140 = sadd.s32 1, %s136
              $region38: #{_resample_padded.1} parent=31 // loop_footer_branch
                %135 = sbr.rel target = $region34
              $region39: #{_resample_padded.1} parent=31 // loop_exit
                _
            $region32: #{_resample_padded.1} parent=27 // pred_fallthru
              _
            // Predicated region
            $region40: #{_resample_padded.1} parent=27 // pred_check
              _
            $region41: #{_resample_padded.1} parent=27 // pred_check_branch
              %200 = sbr.rel target = $region43
            $region42: #{_resample_padded.1} parent=27 // pred_region
              _
            $region43: #{_resample_padded.1} parent=27 // pred_fallthru
              _
          $region28: #{_resample_padded.1} parent=23 // pred_fallthru
            _
          %201 = vnop
        $region24: #{_resample_padded.1} parent=19 // pred_fallthru
          _
      $region20: #{_resample_padded.1} parent=5 // pred_fallthru
        _
      %p202 = scmp.le.s32.totalorder 1, %s8
      %p203 = scmp.lt.s32.totalorder %s8, 5
      %p204 = pnand %p202, %p203
      %p205 = pneg %p204
      // Predicated region
      $region44: #{_resample_padded.1} parent=5 // pred_check
        _
      $region45: #{_resample_padded.1} parent=5 // pred_check_branch
        %207 = sbr.rel (%p204) target = $region47
      $region46: #{_resample_padded.1} parent=5 // pred_region
        %s208 = ssub.s32 %s8, 1
        %s209 = sand.u32 %s35, 1
        %s210 = sand.u32 %s35, 1
        %s211 = smul.addr %s210, 224
        %s212 = scalar_lea.vmem [#allocation2], %s211
        // Predicated region
        $region48: #{_resample_padded.1} parent=46 // pred_check
          %p213 = pneg %p48
        $region49: #{_resample_padded.1} parent=46 // pred_check_branch
          %215 = sbr.rel (%p213) target = $region51
        $region50: #{_resample_padded.1} parent=46 // pred_region
          _
        $region51: #{_resample_padded.1} parent=46 // pred_fallthru
          _
        %s216 = sand.u32 %s35, 1
        %s217 = sand.u32 %s35, 1
        %s218 = smul.addr %s217, 224
        %s219 = scalar_lea.vmem [#allocation2], %s218
        %p220 = pneg %p48
        %p221 = pneg %p45
        %p222 = pneg %p69
        %p223 = pneg %p66
        %p224 = pneg %p97
        %p225 = pneg %p94
        %s226 = sand.u32 %s84, 1
        %s227 = sand.u32 %s84, 1
        %s228 = smul.addr %s227, 112
        %s229 = scalar_lea.vmem [#allocation3], %s228
        %s230 = smul.u32 7, %s18
        %s231 = smul.u32 7, %s18
        %v232 = vld [vmem:[%s1] sm:$0xff]
        %v233 = vld [vmem:[%s1 + $0x8] sm:$0x3]
        %v234 = vld [vmem:[%s212] sm:$0xff]
        %v235 = vld [vmem:[%s212 + $0x8] sm:$0xff]
        %v236 = vld [vmem:[%s212 + $0x10] sm:$0xff]
        %v237 = vld [vmem:[%s212 + $0x18] sm:$0xff]
        %v238 = vld [vmem:[%s212 + $0x38] sm:$0xff]
        %v239 = vld [vmem:[%s212 + $0x40] sm:$0xff]
        %v240 = vld [vmem:[%s212 + $0x48] sm:$0xff]
        %v241 = vld [vmem:[%s212 + $0x50] sm:$0xff]
        %v242 = vld [vmem:[%s212 + $0x70] sm:$0xff]
        %v243 = vld [vmem:[%s212 + $0x78] sm:$0xff]
        %v244 = vld [vmem:[%s212 + $0x80] sm:$0xff]
        %v245 = vld [vmem:[%s212 + $0x88] sm:$0xff]
        %v246 = vld [vmem:[%s212 + $0xa8] sm:$0x7]
        %v247 = vld [vmem:[%s212 + $0xb0] sm:$0x7]
        %v248 = vld [vmem:[%s212 + $0xb8] sm:$0x7]
        %v249 = vld [vmem:[%s212 + $0xc0] sm:$0x7]
        %vm250 = vcmask 220160
        %v252 = vsel %vm250, %v232, 0
        %v255 = vsel %vm250, %v233, 0
        %vm257 = vcmask 1042432
        %v259 = vsel %vm257, %v246, 0
        %v262 = vsel %vm257, %v247, 0
        %v265 = vsel %vm257, %v248, 0
        %v268 = vsel %vm257, %v249, 0
        %270 = vmatprep.subr.mxu0 %v235
        %271 = vmatpush1.msra.mxu0 %v234
        %272 = vmatprep.subr.mxu0 %v239
        %273 = vmatpush1.msra.mxu0 %v238
        %274 = vmatprep.subr.mxu0 %v243
        %275 = vmatpush1.msra.mxu0 %v242
        %276 = vmatprep.subr.mxu0 %v262
        %277 = vmatpush1.msra.mxu0 %v259
        %278 = vmatprep.subr.mxu0 0.0
        %279 = vmatpush1.msra.mxu0 0.0
        %280 = vmatprep.subr.mxu0 0.0
        %281 = vmatpush1.msra.mxu0 0.0
        %282 = vmatprep.subr.mxu0 0.0
        %283 = vmatpush1.msra.mxu0 0.0
        %284 = vmatprep.subr.mxu0 0.0
        %285 = vmatpush1.msra.mxu0 0.0
        %286 = vmatprep.subr.mxu0 0.0
        %287 = vmatpush1.msra.mxu0 0.0
        %288 = vmatprep.subr.mxu0 0.0
        %289 = vmatpush1.msra.mxu0 0.0
        %290 = vmatprep.subr.mxu0 0.0
        %291 = vmatpush1.msra.mxu0 0.0
        %292 = vmatprep.subr.mxu0 0.0
        %293 = vmatpush1.msra.mxu0 0.0
        %294 = vmatprep.subr.mxu0 0.0
        %295 = vmatpush1.msra.mxu0 0.0
        %296 = vmatprep.subr.mxu0 0.0
        %297 = vmatpush1.msra.mxu0 0.0
        %298 = vmatprep.subr.mxu0 0.0
        %299 = vmatpush1.msra.mxu0 0.0
        %300 = vmatprep.subr.mxu0 0.0
        %301 = vmatpush1.msra.mxu0 0.0
        %302 = vmatprep.subr.mxu0 0.0
        %303 = vmatpush1.msra.mxu0 0.0
        %304 = vmatprep.subr.mxu0 0.0
        %305 = vmatpush1.msra.mxu0 0.0
        %306 = vmatprep.subr.mxu0 0.0
        %307 = vmatpush1.msra.mxu0 0.0
        %308 = vmatprep.subr.mxu0 0.0
        %309 = vmatpush1.msra.mxu0 0.0
        %310 = vmatprep.subr.mxu0 0.0
        %311 = vmatpush1.msra.mxu0 0.0
        %312 = vmatprep.subr.mxu0 0.0
        %313 = vmatpush1.msra.mxu0 0.0
        %314 = vmatprep.subr.mxu0 0.0
        %315 = vmatpush1.msra.mxu0 0.0
        %316 = vmatprep.subr.mxu0 0.0
        %317 = vmatpush1.msra.mxu0 0.0
        %318 = vmatprep.subr.mxu0 0.0
        %319 = vmatpush1.msra.mxu0 0.0
        %320 = vmatprep.subr.mxu0 0.0
        %321 = vmatpush1.msra.mxu0 0.0
        %322 = vmatprep.subr.mxu0 0.0
        %323 = vmatpush1.msra.mxu0 0.0
        %324 = vmatprep.subr.mxu0 0.0
        %325 = vmatpush1.msra.mxu0 0.0
        %326 = vmatprep.subr.mxu0 0.0
        %327 = vmatpush1.msra.mxu0 0.0
        %328 = vmatprep.subr.mxu0 0.0
        %329 = vmatpush1.msra.mxu0 0.0
        %330 = vmatprep.subr.mxu0 0.0
        %331 = vmatpush1.msra.mxu0 0.0
        %332 = vmatprep.subr.mxu0 0.0
        %333 = vmatpush1.msra.mxu0 0.0
        %334 = vmatprep.mubr.f32.mxu0 0.0
        %335 = vmatmul.mubr.f32.gmra.mrb[0].mxu0 %v252
        %v336 = vpop.f32.mrb[0].mxu0
        %v337 = vadd.f32 0.0, %v336
        %v338 = vpop.f32.mrb[0].mxu0
        %v339 = vadd.f32 0.0, %v338
        %340 = vmatprep.mubr.f32.mxu0 0.0
        %341 = vmatmul.mubr.f32.gmra.mrb[0].mxu0 %v255
        %v342 = vpop.f32.mrb[0].mxu0
        %v343 = vadd.f32 0.0, %v342
        %v344 = vpop.f32.mrb[0].mxu0
        %v345 = vadd.f32 0.0, %v344
        %346 = vdwg.mxu0
        %347 = vmatprep.subr.mxu0 %v237
        %348 = vmatpush1.msra.mxu0 %v236
        %349 = vmatprep.subr.mxu0 %v241
        %350 = vmatpush1.msra.mxu0 %v240
        %351 = vmatprep.subr.mxu0 %v245
        %352 = vmatpush1.msra.mxu0 %v244
        %353 = vmatprep.subr.mxu0 %v268
        %354 = vmatpush1.msra.mxu0 %v265
        %355 = vmatprep.subr.mxu0 0.0
        %356 = vmatpush1.msra.mxu0 0.0
        %357 = vmatprep.subr.mxu0 0.0
        %358 = vmatpush1.msra.mxu0 0.0
        %359 = vmatprep.subr.mxu0 0.0
        %360 = vmatpush1.msra.mxu0 0.0
        %361 = vmatprep.subr.mxu0 0.0
        %362 = vmatpush1.msra.mxu0 0.0
        %363 = vmatprep.subr.mxu0 0.0
        %364 = vmatpush1.msra.mxu0 0.0
        %365 = vmatprep.subr.mxu0 0.0
        %366 = vmatpush1.msra.mxu0 0.0
        %367 = vmatprep.subr.mxu0 0.0
        %368 = vmatpush1.msra.mxu0 0.0
        %369 = vmatprep.subr.mxu0 0.0
        %370 = vmatpush1.msra.mxu0 0.0
        %371 = vmatprep.subr.mxu0 0.0
        %372 = vmatpush1.msra.mxu0 0.0
        %373 = vmatprep.subr.mxu0 0.0
        %374 = vmatpush1.msra.mxu0 0.0
        %375 = vmatprep.subr.mxu0 0.0
        %376 = vmatpush1.msra.mxu0 0.0
        %377 = vmatprep.subr.mxu0 0.0
        %378 = vmatpush1.msra.mxu0 0.0
        %379 = vmatprep.subr.mxu0 0.0
        %380 = vmatpush1.msra.mxu0 0.0
        %381 = vmatprep.subr.mxu0 0.0
        %382 = vmatpush1.msra.mxu0 0.0
        %383 = vmatprep.subr.mxu0 0.0
        %384 = vmatpush1.msra.mxu0 0.0
        %385 = vmatprep.subr.mxu0 0.0
        %386 = vmatpush1.msra.mxu0 0.0
        %387 = vmatprep.subr.mxu0 0.0
        %388 = vmatpush1.msra.mxu0 0.0
        %389 = vmatprep.subr.mxu0 0.0
        %390 = vmatpush1.msra.mxu0 0.0
        %391 = vmatprep.subr.mxu0 0.0
        %392 = vmatpush1.msra.mxu0 0.0
        %393 = vmatprep.subr.mxu0 0.0
        %394 = vmatpush1.msra.mxu0 0.0
        %395 = vmatprep.subr.mxu0 0.0
        %396 = vmatpush1.msra.mxu0 0.0
        %397 = vmatprep.subr.mxu0 0.0
        %398 = vmatpush1.msra.mxu0 0.0
        %399 = vmatprep.subr.mxu0 0.0
        %400 = vmatpush1.msra.mxu0 0.0
        %401 = vmatprep.subr.mxu0 0.0
        %402 = vmatpush1.msra.mxu0 0.0
        %403 = vmatprep.subr.mxu0 0.0
        %404 = vmatpush1.msra.mxu0 0.0
        %405 = vmatprep.subr.mxu0 0.0
        %406 = vmatpush1.msra.mxu0 0.0
        %407 = vmatprep.subr.mxu0 0.0
        %408 = vmatpush1.msra.mxu0 0.0
        %409 = vmatprep.subr.mxu0 0.0
        %410 = vmatpush1.msra.mxu0 0.0
        %411 = vmatprep.mubr.f32.mxu0 0.0
        %412 = vmatmul.mubr.f32.gmra.mrb[0].mxu0 %v252
        %v413 = vpop.f32.mrb[0].mxu0
        %v414 = vadd.f32 0.0, %v413
        %v415 = vpop.f32.mrb[0].mxu0
        %v416 = vadd.f32 0.0, %v415
        %417 = vmatprep.mubr.f32.mxu0 0.0
        %418 = vmatmul.mubr.f32.gmra.mrb[0].mxu0 %v255
        %v419 = vpop.f32.mrb[0].mxu0
        %v420 = vadd.f32 0.0, %v419
        %v421 = vpop.f32.mrb[0].mxu0
        %v422 = vadd.f32 0.0, %v421
        %423 = vdwg.mxu0
        %424 = vst [vmem:[%s229] sm:$0xff] %v337
        %425 = vst [vmem:[%s229 + $0x8] sm:$0xff] %v339
        %426 = vst [vmem:[%s229 + $0x10] sm:$0xff] %v414
        %427 = vst [vmem:[%s229 + $0x18] sm:$0xff] %v416
        %428 = vst [vmem:[%s229 + $0x38] sm:$0x3] %v343
        %429 = vst [vmem:[%s229 + $0x40] sm:$0x3] %v345
        %430 = vst [vmem:[%s229 + $0x48] sm:$0x3] %v420
        %431 = vst [vmem:[%s229 + $0x50] sm:$0x3] %v422
        %v432 = vld [vmem:[%s212 + $0x20] sm:$0xff]
        %v433 = vld [vmem:[%s212 + $0x28] sm:$0xff]
        %v434 = vld [vmem:[%s212 + $0x30] sm:$0xff]
        %v435 = vld [vmem:[%s212 + $0x58] sm:$0xff]
        %v436 = vld [vmem:[%s212 + $0x60] sm:$0xff]
        %v437 = vld [vmem:[%s212 + $0x68] sm:$0xff]
        %v438 = vld [vmem:[%s212 + $0x90] sm:$0xff]
        %v439 = vld [vmem:[%s212 + $0x98] sm:$0xff]
        %v440 = vld [vmem:[%s212 + $0xa0] sm:$0xff]
        %v441 = vld [vmem:[%s212 + $0xc8] sm:$0x7]
        %v442 = vld [vmem:[%s212 + $0xd0] sm:$0x7]
        %v443 = vld [vmem:[%s212 + $0xd8] sm:$0x7]
        %v445 = vsel %vm257, %v441, 0
        %v448 = vsel %vm257, %v442, 0
        %v451 = vsel %vm257, %v443, 0
        %453 = vmatprep.subr.mxu0 %v433
        %454 = vmatpush1.msra.mxu0 %v432
        %455 = vmatprep.subr.mxu0 %v436
        %456 = vmatpush1.msra.mxu0 %v435
        %457 = vmatprep.subr.mxu0 %v439
        %458 = vmatpush1.msra.mxu0 %v438
        %459 = vmatprep.subr.mxu0 %v448
        %460 = vmatpush1.msra.mxu0 %v445
        %461 = vmatprep.subr.mxu0 0.0
        %462 = vmatpush1.msra.mxu0 0.0
        %463 = vmatprep.subr.mxu0 0.0
        %464 = vmatpush1.msra.mxu0 0.0
        %465 = vmatprep.subr.mxu0 0.0
        %466 = vmatpush1.msra.mxu0 0.0
        %467 = vmatprep.subr.mxu0 0.0
        %468 = vmatpush1.msra.mxu0 0.0
        %469 = vmatprep.subr.mxu0 0.0
        %470 = vmatpush1.msra.mxu0 0.0
        %471 = vmatprep.subr.mxu0 0.0
        %472 = vmatpush1.msra.mxu0 0.0
        %473 = vmatprep.subr.mxu0 0.0
        %474 = vmatpush1.msra.mxu0 0.0
        %475 = vmatprep.subr.mxu0 0.0
        %476 = vmatpush1.msra.mxu0 0.0
        %477 = vmatprep.subr.mxu0 0.0
        %478 = vmatpush1.msra.mxu0 0.0
        %479 = vmatprep.subr.mxu0 0.0
        %480 = vmatpush1.msra.mxu0 0.0
        %481 = vmatprep.subr.mxu0 0.0
        %482 = vmatpush1.msra.mxu0 0.0
        %483 = vmatprep.subr.mxu0 0.0
        %484 = vmatpush1.msra.mxu0 0.0
        %485 = vmatprep.subr.mxu0 0.0
        %486 = vmatpush1.msra.mxu0 0.0
        %487 = vmatprep.subr.mxu0 0.0
        %488 = vmatpush1.msra.mxu0 0.0
        %489 = vmatprep.subr.mxu0 0.0
        %490 = vmatpush1.msra.mxu0 0.0
        %491 = vmatprep.subr.mxu0 0.0
        %492 = vmatpush1.msra.mxu0 0.0
        %493 = vmatprep.subr.mxu0 0.0
        %494 = vmatpush1.msra.mxu0 0.0
        %495 = vmatprep.subr.mxu0 0.0
        %496 = vmatpush1.msra.mxu0 0.0
        %497 = vmatprep.subr.mxu0 0.0
        %498 = vmatpush1.msra.mxu0 0.0
        %499 = vmatprep.subr.mxu0 0.0
        %500 = vmatpush1.msra.mxu0 0.0
        %501 = vmatprep.subr.mxu0 0.0
        %502 = vmatpush1.msra.mxu0 0.0
        %503 = vmatprep.subr.mxu0 0.0
        %504 = vmatpush1.msra.mxu0 0.0
        %505 = vmatprep.subr.mxu0 0.0
        %506 = vmatpush1.msra.mxu0 0.0
        %507 = vmatprep.subr.mxu0 0.0
        %508 = vmatpush1.msra.mxu0 0.0
        %509 = vmatprep.subr.mxu0 0.0
        %510 = vmatpush1.msra.mxu0 0.0
        %511 = vmatprep.subr.mxu0 0.0
        %512 = vmatpush1.msra.mxu0 0.0
        %513 = vmatprep.subr.mxu0 0.0
        %514 = vmatpush1.msra.mxu0 0.0
        %515 = vmatprep.subr.mxu0 0.0
        %516 = vmatpush1.msra.mxu0 0.0
        %517 = vmatprep.mubr.f32.mxu0 0.0
        %518 = vmatmul.mubr.f32.gmra.mrb[0].mxu0 %v252
        %v519 = vpop.f32.mrb[0].mxu0
        %v520 = vadd.f32 0.0, %v519
        %v521 = vpop.f32.mrb[0].mxu0
        %v522 = vadd.f32 0.0, %v521
        %523 = vmatprep.mubr.f32.mxu0 0.0
        %524 = vmatmul.mubr.f32.gmra.mrb[0].mxu0 %v255
        %v525 = vpop.f32.mrb[0].mxu0
        %v526 = vadd.f32 0.0, %v525
        %v527 = vpop.f32.mrb[0].mxu0
        %v528 = vadd.f32 0.0, %v527
        %529 = vdwg.mxu0
        %530 = vmatprep.subr.mxu0 0.0
        %531 = vmatpush1.msra.mxu0 %v434
        %532 = vmatprep.subr.mxu0 0.0
        %533 = vmatpush1.msra.mxu0 %v437
        %534 = vmatprep.subr.mxu0 0.0
        %535 = vmatpush1.msra.mxu0 %v440
        %536 = vmatprep.subr.mxu0 0.0
        %537 = vmatpush1.msra.mxu0 %v451
        %538 = vmatprep.subr.mxu0 0.0
        %539 = vmatpush1.msra.mxu0 0.0
        %540 = vmatprep.subr.mxu0 0.0
        %541 = vmatpush1.msra.mxu0 0.0
        %542 = vmatprep.subr.mxu0 0.0
        %543 = vmatpush1.msra.mxu0 0.0
        %544 = vmatprep.subr.mxu0 0.0
        %545 = vmatpush1.msra.mxu0 0.0
        %546 = vmatprep.subr.mxu0 0.0
        %547 = vmatpush1.msra.mxu0 0.0
        %548 = vmatprep.subr.mxu0 0.0
        %549 = vmatpush1.msra.mxu0 0.0
        %550 = vmatprep.subr.mxu0 0.0
        %551 = vmatpush1.msra.mxu0 0.0
        %552 = vmatprep.subr.mxu0 0.0
        %553 = vmatpush1.msra.mxu0 0.0
        %554 = vmatprep.subr.mxu0 0.0
        %555 = vmatpush1.msra.mxu0 0.0
        %556 = vmatprep.subr.mxu0 0.0
        %557 = vmatpush1.msra.mxu0 0.0
        %558 = vmatprep.subr.mxu0 0.0
        %559 = vmatpush1.msra.mxu0 0.0
        %560 = vmatprep.subr.mxu0 0.0
        %561 = vmatpush1.msra.mxu0 0.0
        %562 = vmatprep.subr.mxu0 0.0
        %563 = vmatpush1.msra.mxu0 0.0
        %564 = vmatprep.subr.mxu0 0.0
        %565 = vmatpush1.msra.mxu0 0.0
        %566 = vmatprep.subr.mxu0 0.0
        %567 = vmatpush1.msra.mxu0 0.0
        %568 = vmatprep.subr.mxu0 0.0
        %569 = vmatpush1.msra.mxu0 0.0
        %570 = vmatprep.subr.mxu0 0.0
        %571 = vmatpush1.msra.mxu0 0.0
        %572 = vmatprep.subr.mxu0 0.0
        %573 = vmatpush1.msra.mxu0 0.0
        %574 = vmatprep.subr.mxu0 0.0
        %575 = vmatpush1.msra.mxu0 0.0
        %576 = vmatprep.subr.mxu0 0.0
        %577 = vmatpush1.msra.mxu0 0.0
        %578 = vmatprep.subr.mxu0 0.0
        %579 = vmatpush1.msra.mxu0 0.0
        %580 = vmatprep.subr.mxu0 0.0
        %581 = vmatpush1.msra.mxu0 0.0
        %582 = vmatprep.subr.mxu0 0.0
        %583 = vmatpush1.msra.mxu0 0.0
        %584 = vmatprep.subr.mxu0 0.0
        %585 = vmatpush1.msra.mxu0 0.0
        %586 = vmatprep.subr.mxu0 0.0
        %587 = vmatpush1.msra.mxu0 0.0
        %588 = vmatprep.subr.mxu0 0.0
        %589 = vmatpush1.msra.mxu0 0.0
        %590 = vmatprep.subr.mxu0 0.0
        %591 = vmatpush1.msra.mxu0 0.0
        %592 = vmatprep.subr.mxu0 0.0
        %593 = vmatpush1.msra.mxu0 0.0
        %594 = vmatprep.mubr.f32.mxu0 0.0
        %595 = vmatmul.mubr.f32.gmra.mrb[0].mxu0 %v252
        %v596 = vpop.f32.mrb[0].mxu0
        %v597 = vadd.f32 0.0, %v596
        %v598 = vpop.f32.mrb[0].mxu0
        %599 = vmatprep.mubr.f32.mxu0 0.0
        %600 = vmatmul.mubr.f32.gmra.mrb[0].mxu0 %v255
        %v601 = vpop.f32.mrb[0].mxu0
        %v602 = vadd.f32 0.0, %v601
        %v603 = vpop.f32.mrb[0].mxu0
        %604 = vdwg.mxu0
        %605 = vst [vmem:[%s229 + $0x20] sm:$0xff] %v520
        %606 = vst [vmem:[%s229 + $0x28] sm:$0xff] %v522
        %607 = vst [vmem:[%s229 + $0x30] sm:$0xff] %v597
        %608 = vst [vmem:[%s229 + $0x58] sm:$0x3] %v526
        %609 = vst [vmem:[%s229 + $0x60] sm:$0x3] %v528
        %610 = vst [vmem:[%s229 + $0x68] sm:$0x3] %v602
        %s611 = sand.u32 %s84, 1
        %s612 = sand.u32 %s84, 1
        %s613 = smul.addr %s612, 112
        %s614 = scalar_lea.vmem [#allocation3], %s613
        // Predicated region
        $region52: #{_resample_padded.1} parent=46 // pred_check
          %p615 = pneg %p94
        $region53: #{_resample_padded.1} parent=46 // pred_check_branch
          %617 = sbr.rel (%p615) target = $region55
        $region54: #{_resample_padded.1} parent=46 // pred_region
          %s618 = smul.u32 7, %s18
          %s619 = smul.addr %s17, 28
          %s620 = sadd.s32 %s618, %s619
          %s621 = smul.addr %s620, 8
          %s622 = scalar_lea.vmem %s2, %s621
          // Predicated region
          $region56: #{_resample_padded.1} parent=54 // pred_check
            _
          $region57: #{_resample_padded.1} parent=54 // pred_check_branch
            %624 = sbr.rel (0) target = $region59
          $region58: #{_resample_padded.1} parent=54 // pred_region
            // Predicated region
            $region60: #{_resample_padded.1} parent=58 // pred_check
              _
            $region61: #{_resample_padded.1} parent=58 // pred_check_branch
              %626 = sbr.rel (0) target = $region63
            $region62: #{_resample_padded.1} parent=58 // pred_region
              loop: start=0, step=1, limit=1
              $region64: #{_resample_padded.1} parent=62 // loop_pre_header
                _
              $region65: #{_resample_padded.1} parent=62 // loop_header
                %s628 = sphi 0, %s632
                %p629 = scmp.ge.s32.totalorder %s628, 1
                %s633 = sphi %s614, %s614
                %s634 = sphi %s622, %s622
              $region66: #{_resample_padded.1} parent=62 // loop_header_branch
                %631 = sbr.rel (%p629) target = $region70
              $region67: #{_resample_padded.1} parent=62 // loop_body
                %v635 = vld [vmem:[%s633] sm:$0xff]
                %636 = vst [vmem:[%s634] sm:$0xff] %v635
                %v637 = vld [vmem:[%s633 + $0x8] sm:$0xff]
                %638 = vst [vmem:[%s634 + $0x8] sm:$0xff] %v637
                %v639 = vld [vmem:[%s633 + $0x10] sm:$0xff]
                %640 = vst [vmem:[%s634 + $0x10] sm:$0xff] %v639
                %v641 = vld [vmem:[%s633 + $0x18] sm:$0xff]
                %642 = vst [vmem:[%s634 + $0x18] sm:$0xff] %v641
                %v643 = vld [vmem:[%s633 + $0x20] sm:$0xff]
                %644 = vst [vmem:[%s634 + $0x20] sm:$0xff] %v643
                %v645 = vld [vmem:[%s633 + $0x28] sm:$0xff]
                %646 = vst [vmem:[%s634 + $0x28] sm:$0xff] %v645
                %v647 = vld [vmem:[%s633 + $0x30] sm:$0xff]
                %648 = vst [vmem:[%s634 + $0x30] sm:$0xff] %v647
                %v649 = vld [vmem:[%s633 + $0x38] sm:$0xff]
                %650 = vst [vmem:[%s634 + $0x70] sm:$0xff] %v649
                %v651 = vld [vmem:[%s633 + $0x40] sm:$0xff]
                %652 = vst [vmem:[%s634 + $0x78] sm:$0xff] %v651
                %v653 = vld [vmem:[%s633 + $0x48] sm:$0xff]
                %654 = vst [vmem:[%s634 + $0x80] sm:$0xff] %v653
                %v655 = vld [vmem:[%s633 + $0x50] sm:$0xff]
                %656 = vst [vmem:[%s634 + $0x88] sm:$0xff] %v655
                %v657 = vld [vmem:[%s633 + $0x58] sm:$0xff]
                %658 = vst [vmem:[%s634 + $0x90] sm:$0xff] %v657
                %v659 = vld [vmem:[%s633 + $0x60] sm:$0xff]
                %660 = vst [vmem:[%s634 + $0x98] sm:$0xff] %v659
                %v661 = vld [vmem:[%s633 + $0x68] sm:$0xff]
                %662 = vst [vmem:[%s634 + $0xa0] sm:$0xff] %v661
              $region68: #{_resample_padded.1} parent=62 // loop_footer
                %s632 = sadd.s32 1, %s628
              $region69: #{_resample_padded.1} parent=62 // loop_footer_branch
                %627 = sbr.rel target = $region65
              $region70: #{_resample_padded.1} parent=62 // loop_exit
                _
            $region63: #{_resample_padded.1} parent=58 // pred_fallthru
              _
            // Predicated region
            $region71: #{_resample_padded.1} parent=58 // pred_check
              _
            $region72: #{_resample_padded.1} parent=58 // pred_check_branch
              %664 = sbr.rel target = $region74
            $region73: #{_resample_padded.1} parent=58 // pred_region
              _
            $region74: #{_resample_padded.1} parent=58 // pred_fallthru
              _
          $region59: #{_resample_padded.1} parent=54 // pred_fallthru
            _
          %665 = vnop
        $region55: #{_resample_padded.1} parent=46 // pred_fallthru
          _
      $region47: #{_resample_padded.1} parent=5 // pred_fallthru
        _
      %p666 = scmp.le.s32.totalorder 2, %s8
      // Predicated region
      $region75: #{_resample_padded.1} parent=5 // pred_check
        %p667 = pneg %p666
      $region76: #{_resample_padded.1} parent=5 // pred_check_branch
        %669 = sbr.rel (%p667) target = $region78
      $region77: #{_resample_padded.1} parent=5 // pred_region
        %s670 = ssub.s32 %s8, 2
        // Predicated region
        $region79: #{_resample_padded.1} parent=77 // pred_check
          %p671 = pneg %p100
        $region80: #{_resample_padded.1} parent=77 // pred_check_branch
          %673 = sbr.rel (%p671) target = $region82
        $region81: #{_resample_padded.1} parent=77 // pred_region
          %s674 = sand.u32 %s85, 1
          %s675 = sand.u32 %s85, 1
          %s676 = smul.addr %s675, 112
          %s677 = scalar_lea.vmem [#allocation3], %s676
        $region82: #{_resample_padded.1} parent=77 // pred_fallthru
          _
      $region78: #{_resample_padded.1} parent=5 // pred_fallthru
        _
    $region6: #{_resample_padded.1} parent=1 // loop_footer
      %s12 = sadd.s32 1, %s8
    $region7: #{_resample_padded.1} parent=1 // loop_footer_branch
      %7 = sbr.rel target = $region3
    $region8: #{_resample_padded.1} parent=1 // loop_exit
      _

</llo_original>
